<compile_context>
chip_gen: v6e
topology: v6e:2x2x1
jax: 0.10.0
libtpu: 0.0.40
codegen_flags: <defaults>
</compile_context>

<pallas_src>
import functools

import jax
import jax.numpy as jnp
from jax.experimental import pallas as pl
from jax.experimental.pallas import tpu as pltpu


_SENTINEL = 1e30  # padded d_p rows -> +S, padded d_n rows -> -S  => hinge 0


def _round_up(x, m):
    return ((x + m - 1) // m) * m


def _pick_batch_tile(B, D, P, N, itemsize):
    """Largest batch tile that keeps double-buffered inputs + f32 temps
    comfortably inside the smallest scoped-VMEM default (v5e/v6e/v7x)."""
    per_row = D * (1 + P + N) * (2 * itemsize + 4) + 256
    budget = 16 * 1024 * 1024
    tb = min(max(budget // per_row, 8), 1024)
    if tb >= B:
        return B                        # single full-batch tile
    return max(8, (tb // 8) * 8)        # multiple of 8 for (8, 128) tiling


# ---------------------------------------------------------------------------
# Kernel 1: per-row cosine similarities  d_p[b, m], d_n[b, m]
# ---------------------------------------------------------------------------
def _cosine_sim_kernel(a_ref, p_ref, n_ref, dp_ref, dn_ref, *, eps):
    a = a_ref[...].astype(jnp.float32)                        # [TB, D]
    a_sq = jnp.sum(a * a, axis=-1, keepdims=True)             # [TB, 1]
    eps2 = eps * eps

    def write_cos(x_ref, out_ref):
        m_count = x_ref.shape[1]
        if m_count <= 8:
            # Few positives/negatives: static per-column loop, no
            # [TB, M, D] broadcast temporary (keeps vreg pressure low).
            for m in range(m_count):
                xm = x_ref[:, m, :].astype(jnp.float32)        # [TB, D]
                w12 = jnp.sum(a * xm, axis=-1, keepdims=True)  # [TB, 1]
                w2 = jnp.sum(xm * xm, axis=-1, keepdims=True)  # [TB, 1]
                inv = jax.lax.rsqrt(jnp.maximum(a_sq * w2, eps2))
                out_ref[:, m:m + 1] = (w12 * inv).astype(jnp.float32)
        else:
            x = x_ref[...].astype(jnp.float32)                 # [TB, M, D]
            w12 = jnp.sum(a[:, None, :] * x, axis=-1)          # [TB, M]
            w2 = jnp.sum(x * x, axis=-1)                       # [TB, M]
            inv = jax.lax.rsqrt(jnp.maximum(a_sq * w2, eps2))
            out_ref[...] = (w12 * inv).astype(jnp.float32)

    write_cos(p_ref, dp_ref)
    write_cos(n_ref, dn_ref)


# ---------------------------------------------------------------------------
# Kernel 2: streamed cross-batch hinge reduction
#   total = sum_{i,j,k} max(margin - d_p[i,k] + d_n[j,k], 0)
# ---------------------------------------------------------------------------
def _hinge_reduce_kernel(dp_ref, dnT_ref, o_ref, acc_ref, *,
                         margin, inv_div, num_k):
    i = pl.program_id(0)
    j = pl.program_id(1)

    @pl.when((i == 0) & (j == 0))
    def _init():
        acc_ref[...] = jnp.zeros_like(acc_ref)

    dp = dp_ref[...]                                   # [TI, K] f32
    dn = dnT_ref[...]                                  # [K, TJ] f32

    part = jnp.maximum(margin - dp[:, 0:1] + dn[0:1, :], 0.0)       # [TI, TJ]
    for k in range(1, num_k):
        part = part + jnp.maximum(margin - dp[:, k:k + 1] + dn[k:k + 1, :],
                                  0.0)
    acc_ref[...] += part

    @pl.when((i == pl.num_programs(0) - 1) & (j == pl.num_programs(1) - 1))
    def _finalize():
        total = jnp.sum(acc_ref[...])                  # single XLU collapse
        o_ref[...] = jnp.broadcast_to(total * inv_div, (1, 1)).astype(
            jnp.float32)


# ---------------------------------------------------------------------------
# Wrapper
# ---------------------------------------------------------------------------
def triplet_margin_cosine_loss(anchor, positive, negative,
                               margin=1.0, eps=1e-08, sum_loss=False):
    assert anchor.ndim == 2, 'Anchor and positive must be 2D matrices.'
    assert positive.ndim in (2, 3), 'Positive must be 2D or 3D.'
    assert negative.ndim in (2, 3), \
        'Negative must be 2D (1 negative sample) or 3D matrix.'
    assert margin > 0.0, 'Margin should be positive value.'

    B, D = anchor.shape
    p3 = positive if positive.ndim == 3 else positive.reshape(B, 1, D)
    n3 = negative if negative.ndim == 3 else negative.reshape(B, 1, D)
    P, N = p3.shape[1], n3.shape[1]
    K = max(P, N)
    # Same broadcast rule the torch code relies on for d_p.unsqueeze(1)+d_n.
    assert P in (1, K) and N in (1, K), \
        'Number of positives/negatives must match (or one of them be 1).'

    itemsize = max(jnp.dtype(anchor.dtype).itemsize,
                   jnp.dtype(p3.dtype).itemsize,
                   jnp.dtype(n3.dtype).itemsize)
    TB = _pick_batch_tile(B, D, P, N, itemsize)

    # ---- kernel 1: cosine similarities (batch-tiled, pipelined) ----------
    d_p, d_n = pl.pallas_call(
        functools.partial(_cosine_sim_kernel, eps=float(eps)),
        out_shape=(jax.ShapeDtypeStruct((B, P), jnp.float32),
                   jax.ShapeDtypeStruct((B, N), jnp.float32)),
        grid=(pl.cdiv(B, TB),),
        in_specs=[pl.BlockSpec((TB, D), lambda i: (i, 0)),
                  pl.BlockSpec((TB, P, D), lambda i: (i, 0, 0)),
                  pl.BlockSpec((TB, N, D), lambda i: (i, 0, 0))],
        out_specs=(pl.BlockSpec((TB, P), lambda i: (i, 0)),
                   pl.BlockSpec((TB, N), lambda i: (i, 0))),
        compiler_params=pltpu.CompilerParams(
            dimension_semantics=("parallel",)),
    )(anchor, p3, n3)

    # ---- tiny glue on [B, K] arrays: broadcast, sentinel-pad, transpose --
    dp_b = jnp.broadcast_to(d_p, (B, K))
    dn_b = jnp.broadcast_to(d_n, (B, K))

    TI = min(256, _round_up(B, 8))
    TJ = min(256, _round_up(B, 128))
    Bi = _round_up(B, TI)
    Bj = _round_up(B, TJ)
    dp_pad = jnp.pad(dp_b, ((0, Bi - B), (0, 0)),
                     constant_values=_SENTINEL)                # [Bi, K]
    dnT_pad = jnp.pad(dn_b, ((0, Bj - B), (0, 0)),
                      constant_values=-_SENTINEL).T            # [K, Bj]

    # torch: .mean(dim=1) divides by B; full mean additionally by B*K.
    inv_div = (1.0 / B) if sum_loss else (1.0 / (B * B * K))

    # ---- kernel 2: streamed cross-batch hinge reduction ------------------
    out = pl.pallas_call(
        functools.partial(_hinge_reduce_kernel, margin=float(margin),
                          inv_div=float(inv_div), num_k=K),
        out_shape=jax.ShapeDtypeStruct((1, 1), jnp.float32),
        grid=(Bi // TI, Bj // TJ),
        in_specs=[pl.BlockSpec((TI, K), lambda i, j: (i, 0)),
                  pl.BlockSpec((K, TJ), lambda i, j: (0, j))],
        out_specs=pl.BlockSpec((1, 1), lambda i, j: (0, 0)),
        scratch_shapes=[pltpu.VMEM((TI, TJ), jnp.float32)],
        compiler_params=pltpu.CompilerParams(
            dimension_semantics=("arbitrary", "arbitrary")),
    )(dp_pad, dnT_pad)
    return out[0, 0]


class TripletMarginCosineLoss:
    """JAX/Pallas mirror of the PyTorch nn.Module (no parameters)."""

    def __init__(self, margin=1.0, eps=1e-08, sum_loss=False):
        self.margin = margin
        self.eps = eps
        self.sum_loss = sum_loss

    def __call__(self, anchor, positive, negative):
        return triplet_margin_cosine_loss(
            anchor, positive, negative, self.margin, self.eps, self.sum_loss)


def _reference(anchor, positive, negative, margin=1.0, eps=1e-8,
               sum_loss=False):
    """Pure-jnp reference reproducing the PyTorch code line by line."""
    def cos(x1, x2):
        w12 = jnp.sum(x1 * x2, -1)
        w1 = jnp.sum(x1 * x1, -1)
        w2 = jnp.sum(x2 * x2, -1)
        return w12 / jnp.sqrt(jnp.clip(w1 * w2, eps * eps, None))

    if positive.ndim == 2:
        d_p = cos(anchor, positive)[:, None]
    else:
        d_p = cos(anchor[:, None, :], positive)
    if negative.ndim == 2:
        d_n = cos(anchor, negative)[:, None]
    else:
        d_n = cos(anchor[:, None, :], negative)

    dist_hinge = jnp.clip(
        margin - d_p[:, None, :] + d_n[None, :, :], 0.0, None).mean(axis=1)
    return jnp.sum(dist_hinge) if sum_loss else jnp.mean(dist_hinge)


if __name__ == "__main__":
    key = jax.random.PRNGKey(0)
    ka, kp, kn, kp3 = jax.random.split(key, 4)
    B, D, N = 8, 32, 4
    anchor = jax.random.normal(ka, (B, D), dtype=jnp.float32)
    positive = jax.random.normal(kp, (B, D), dtype=jnp.float32)      # 2D positive
    negative = jax.random.normal(kn, (B, N, D), dtype=jnp.float32)   # 3D negatives

    # config 1: 2D positive, mean loss
    loss_mod = TripletMarginCosineLoss(margin=1.0, eps=1e-08, sum_loss=False)
    loss = jax.block_until_ready(loss_mod(anchor, positive, negative))
    ref = _reference(anchor, positive, negative, 1.0, 1e-08, False)
    assert jnp.allclose(loss, ref, atol=1e-5, rtol=1e-5), (loss, ref)

    # config 2: 3D positives, sum loss
    positive3 = jax.random.normal(kp3, (B, N, D), dtype=jnp.float32)
    loss2 = jax.block_until_ready(
        triplet_margin_cosine_loss(anchor, positive3, negative,
                                   margin=0.5, eps=1e-08, sum_loss=True))
    ref2 = _reference(anchor, positive3, negative, 0.5, 1e-08, True)
    assert jnp.allclose(loss2, ref2, atol=1e-5, rtol=1e-5), (loss2, ref2)

    print("KERNEL_OK")
</pallas_src>

<mosaic_0001>
module attributes {stable_mosaic.version = 11 : i64} {
  func.func @_cosine_sim_kernel(%arg0: i32, %arg1: memref<8x32xf32, #tpu.memory_space<vmem>>, %arg2: memref<8x1x32xf32, #tpu.memory_space<vmem>>, %arg3: memref<8x4x32xf32, #tpu.memory_space<vmem>>, %arg4: memref<8x1xf32, #tpu.memory_space<vmem>>, %arg5: memref<8x4xf32, #tpu.memory_space<vmem>>) attributes {dimension_semantics = [#tpu.dimension_semantics<parallel>], iteration_bounds = array<i64: 1>, scalar_prefetch = 0 : i64, scratch_operands = 0 : i64, tpu.core_type = #tpu.core_type<tc>, window_params = [{transform_indices = @transform_0, window_bounds = array<i64: 8, 32>}, {transform_indices = @transform_1, window_bounds = array<i64: 8, 1, 32>}, {transform_indices = @transform_2, window_bounds = array<i64: 8, 4, 32>}, {transform_indices = @transform_3, window_bounds = array<i64: 8, 1>}, {transform_indices = @transform_4, window_bounds = array<i64: 8, 4>}]} {
    %c0 = arith.constant 0 : index
    %c0_0 = arith.constant 0 : index
    %0 = vector.load %arg1[%c0, %c0_0] : memref<8x32xf32, #tpu.memory_space<vmem>>, vector<8x32xf32>
    %1 = arith.mulf %0, %0 : vector<8x32xf32>
    %cst = arith.constant dense<0.000000e+00> : vector<8xf32>
    %2 = vector.multi_reduction <add>, %1, %cst [1] : vector<8x32xf32> to vector<8xf32>
    %3 = vector.shape_cast %2 : vector<8xf32> to vector<8x1xf32>
    %c0_1 = arith.constant 0 : index
    %c0_2 = arith.constant 0 : index
    %c0_3 = arith.constant 0 : index
    %4 = vector.load %arg2[%c0_1, %c0_2, %c0_3] : memref<8x1x32xf32, #tpu.memory_space<vmem>>, vector<8x1x32xf32>
    %5 = vector.shape_cast %4 : vector<8x1x32xf32> to vector<8x32xf32>
    %6 = arith.mulf %0, %5 : vector<8x32xf32>
    %cst_4 = arith.constant dense<0.000000e+00> : vector<8xf32>
    %7 = vector.multi_reduction <add>, %6, %cst_4 [1] : vector<8x32xf32> to vector<8xf32>
    %8 = vector.shape_cast %7 : vector<8xf32> to vector<8x1xf32>
    %9 = arith.mulf %5, %5 : vector<8x32xf32>
    %cst_5 = arith.constant dense<0.000000e+00> : vector<8xf32>
    %10 = vector.multi_reduction <add>, %9, %cst_5 [1] : vector<8x32xf32> to vector<8xf32>
    %11 = vector.shape_cast %10 : vector<8xf32> to vector<8x1xf32>
    %12 = arith.mulf %3, %11 : vector<8x1xf32>
    %cst_6 = arith.constant 1.000000e-16 : f32
    %13 = vector.broadcast %cst_6 : f32 to vector<8x1xf32>
    %14 = arith.maximumf %12, %13 : vector<8x1xf32>
    %15 = math.rsqrt %14 : vector<8x1xf32>
    %16 = arith.mulf %8, %15 : vector<8x1xf32>
    %c0_7 = arith.constant 0 : index
    %c0_8 = arith.constant 0 : index
    %17 = vector.load %arg4[%c0_7, %c0_8] : memref<8x1xf32, #tpu.memory_space<vmem>>, vector<8x1xf32>
    tpu.vector_store %arg4[%c0_7, %c0_8], %16 {strides = array<i32>} : memref<8x1xf32, #tpu.memory_space<vmem>>, vector<8x1xf32>,
    %c0_9 = arith.constant 0 : index
    %c0_10 = arith.constant 0 : index
    %c0_11 = arith.constant 0 : index
    %18 = vector.load %arg3[%c0_9, %c0_10, %c0_11] : memref<8x4x32xf32, #tpu.memory_space<vmem>>, vector<8x1x32xf32>
    %19 = vector.shape_cast %18 : vector<8x1x32xf32> to vector<8x32xf32>
    %20 = arith.mulf %0, %19 : vector<8x32xf32>
    %cst_12 = arith.constant dense<0.000000e+00> : vector<8xf32>
    %21 = vector.multi_reduction <add>, %20, %cst_12 [1] : vector<8x32xf32> to vector<8xf32>
    %22 = vector.shape_cast %21 : vector<8xf32> to vector<8x1xf32>
    %23 = arith.mulf %19, %19 : vector<8x32xf32>
    %cst_13 = arith.constant dense<0.000000e+00> : vector<8xf32>
    %24 = vector.multi_reduction <add>, %23, %cst_13 [1] : vector<8x32xf32> to vector<8xf32>
    %25 = vector.shape_cast %24 : vector<8xf32> to vector<8x1xf32>
    %26 = arith.mulf %3, %25 : vector<8x1xf32>
    %cst_14 = arith.constant 1.000000e-16 : f32
    %27 = vector.broadcast %cst_14 : f32 to vector<8x1xf32>
    %28 = arith.maximumf %26, %27 : vector<8x1xf32>
    %29 = math.rsqrt %28 : vector<8x1xf32>
    %30 = arith.mulf %22, %29 : vector<8x1xf32>
    %c0_15 = arith.constant 0 : index
    %c0_16 = arith.constant 0 : index
    %31 = vector.load %arg5[%c0_15, %c0_16] : memref<8x4xf32, #tpu.memory_space<vmem>>, vector<8x1xf32>
    tpu.vector_store %arg5[%c0_15, %c0_16], %30 {strides = array<i32>} : memref<8x4xf32, #tpu.memory_space<vmem>>, vector<8x1xf32>,
    %c0_17 = arith.constant 0 : index
    %c1 = arith.constant 1 : index
    %c0_18 = arith.constant 0 : index
    %32 = vector.load %arg3[%c0_17, %c1, %c0_18] : memref<8x4x32xf32, #tpu.memory_space<vmem>>, vector<8x1x32xf32>
    %33 = vector.shape_cast %32 : vector<8x1x32xf32> to vector<8x32xf32>
    %34 = arith.mulf %0, %33 : vector<8x32xf32>
    %cst_19 = arith.constant dense<0.000000e+00> : vector<8xf32>
    %35 = vector.multi_reduction <add>, %34, %cst_19 [1] : vector<8x32xf32> to vector<8xf32>
    %36 = vector.shape_cast %35 : vector<8xf32> to vector<8x1xf32>
    %37 = arith.mulf %33, %33 : vector<8x32xf32>
    %cst_20 = arith.constant dense<0.000000e+00> : vector<8xf32>
    %38 = vector.multi_reduction <add>, %37, %cst_20 [1] : vector<8x32xf32> to vector<8xf32>
    %39 = vector.shape_cast %38 : vector<8xf32> to vector<8x1xf32>
    %40 = arith.mulf %3, %39 : vector<8x1xf32>
    %cst_21 = arith.constant 1.000000e-16 : f32
    %41 = vector.broadcast %cst_21 : f32 to vector<8x1xf32>
    %42 = arith.maximumf %40, %41 : vector<8x1xf32>
    %43 = math.rsqrt %42 : vector<8x1xf32>
    %44 = arith.mulf %36, %43 : vector<8x1xf32>
    %c0_22 = arith.constant 0 : index
    %c1_23 = arith.constant 1 : index
    %45 = vector.load %arg5[%c0_22, %c1_23] : memref<8x4xf32, #tpu.memory_space<vmem>>, vector<8x1xf32>
    tpu.vector_store %arg5[%c0_22, %c1_23], %44 {strides = array<i32>} : memref<8x4xf32, #tpu.memory_space<vmem>>, vector<8x1xf32>,
    %c0_24 = arith.constant 0 : index
    %c2 = arith.constant 2 : index
    %c0_25 = arith.constant 0 : index
    %46 = vector.load %arg3[%c0_24, %c2, %c0_25] : memref<8x4x32xf32, #tpu.memory_space<vmem>>, vector<8x1x32xf32>
    %47 = vector.shape_cast %46 : vector<8x1x32xf32> to vector<8x32xf32>
    %48 = arith.mulf %0, %47 : vector<8x32xf32>
    %cst_26 = arith.constant dense<0.000000e+00> : vector<8xf32>
    %49 = vector.multi_reduction <add>, %48, %cst_26 [1] : vector<8x32xf32> to vector<8xf32>
    %50 = vector.shape_cast %49 : vector<8xf32> to vector<8x1xf32>
    %51 = arith.mulf %47, %47 : vector<8x32xf32>
    %cst_27 = arith.constant dense<0.000000e+00> : vector<8xf32>
    %52 = vector.multi_reduction <add>, %51, %cst_27 [1] : vector<8x32xf32> to vector<8xf32>
    %53 = vector.shape_cast %52 : vector<8xf32> to vector<8x1xf32>
    %54 = arith.mulf %3, %53 : vector<8x1xf32>
    %cst_28 = arith.constant 1.000000e-16 : f32
    %55 = vector.broadcast %cst_28 : f32 to vector<8x1xf32>
    %56 = arith.maximumf %54, %55 : vector<8x1xf32>
    %57 = math.rsqrt %56 : vector<8x1xf32>
    %58 = arith.mulf %50, %57 : vector<8x1xf32>
    %c0_29 = arith.constant 0 : index
    %c2_30 = arith.constant 2 : index
    %59 = vector.load %arg5[%c0_29, %c2_30] : memref<8x4xf32, #tpu.memory_space<vmem>>, vector<8x1xf32>
    tpu.vector_store %arg5[%c0_29, %c2_30], %58 {strides = array<i32>} : memref<8x4xf32, #tpu.memory_space<vmem>>, vector<8x1xf32>,
    %c0_31 = arith.constant 0 : index
    %c3 = arith.constant 3 : index
    %c0_32 = arith.constant 0 : index
    %60 = vector.load %arg3[%c0_31, %c3, %c0_32] : memref<8x4x32xf32, #tpu.memory_space<vmem>>, vector<8x1x32xf32>
    %61 = vector.shape_cast %60 : vector<8x1x32xf32> to vector<8x32xf32>
    %62 = arith.mulf %0, %61 : vector<8x32xf32>
    %cst_33 = arith.constant dense<0.000000e+00> : vector<8xf32>
    %63 = vector.multi_reduction <add>, %62, %cst_33 [1] : vector<8x32xf32> to vector<8xf32>
    %64 = vector.shape_cast %63 : vector<8xf32> to vector<8x1xf32>
    %65 = arith.mulf %61, %61 : vector<8x32xf32>
    %cst_34 = arith.constant dense<0.000000e+00> : vector<8xf32>
    %66 = vector.multi_reduction <add>, %65, %cst_34 [1] : vector<8x32xf32> to vector<8xf32>
    %67 = vector.shape_cast %66 : vector<8xf32> to vector<8x1xf32>
    %68 = arith.mulf %3, %67 : vector<8x1xf32>
    %cst_35 = arith.constant 1.000000e-16 : f32
    %69 = vector.broadcast %cst_35 : f32 to vector<8x1xf32>
    %70 = arith.maximumf %68, %69 : vector<8x1xf32>
    %71 = math.rsqrt %70 : vector<8x1xf32>
    %72 = arith.mulf %64, %71 : vector<8x1xf32>
    %c0_36 = arith.constant 0 : index
    %c3_37 = arith.constant 3 : index
    %73 = vector.load %arg5[%c0_36, %c3_37] : memref<8x4xf32, #tpu.memory_space<vmem>>, vector<8x1xf32>
    tpu.vector_store %arg5[%c0_36, %c3_37], %72 {strides = array<i32>} : memref<8x4xf32, #tpu.memory_space<vmem>>, vector<8x1xf32>,
    return
  }
  func.func @transform_0(%arg0: i32) -> (i32, i32) {
    %c0_i32 = arith.constant 0 : i32
    %c0_i32_0 = arith.constant 0 : i32
    return %arg0, %c0_i32 : i32, i32
  }
  func.func @transform_1(%arg0: i32) -> (i32, i32, i32) {
    %c0_i32 = arith.constant 0 : i32
    %c0_i32_0 = arith.constant 0 : i32
    %c0_i32_1 = arith.constant 0 : i32
    return %arg0, %c0_i32, %c0_i32_0 : i32, i32, i32
  }
  func.func @transform_2(%arg0: i32) -> (i32, i32, i32) {
    %c0_i32 = arith.constant 0 : i32
    %c0_i32_0 = arith.constant 0 : i32
    %c0_i32_1 = arith.constant 0 : i32
    return %arg0, %c0_i32, %c0_i32_0 : i32, i32, i32
  }
  func.func @transform_3(%arg0: i32) -> (i32, i32) {
    %c0_i32 = arith.constant 0 : i32
    %c0_i32_0 = arith.constant 0 : i32
    return %arg0, %c0_i32 : i32, i32
  }
  func.func @transform_4(%arg0: i32) -> (i32, i32) {
    %c0_i32 = arith.constant 0 : i32
    %c0_i32_0 = arith.constant 0 : i32
    return %arg0, %c0_i32 : i32, i32
  }
}

</mosaic_0001>

<llo_original>
// kernel: tpu_custom_call.1
$region0: #{tpu_custom_call.1}
  #allocation0 [shape = 'u32[]', space=smem, size = 0x4, offset = 0x4, fixed_abs, tag = 'smem constant byte address 0x4 - core index']
  #allocation1 [shape = 'u32[144,128]{1,0:T(1,128)}', space=vmem, size = 0x12000, scoped, tag = 'internal scratch']
  %s0 = inlined_call_operand.hbm [shape: f32[8,32], index: 0, kind: input, shape index: {}]
  %s1 = inlined_call_operand.hbm [shape: f32[8,1,32], index: 1, kind: input, shape index: {}]
  %s2 = inlined_call_operand.hbm [shape: f32[8,4,32], index: 2, kind: input, shape index: {}]
  %s3 = inlined_call_operand.vmem [shape: f32[8,1], index: 3, kind: output, shape index: {0}]
  %s4 = inlined_call_operand.vmem [shape: f32[8,4], index: 4, kind: output, shape index: {1}]
  %5 = xla_tuple %s3, %s4
  %s6 = sld [smem:[#allocation0]]
  $region42: #{tpu_custom_call.1} parent=0
    _
  %s8 = ssub.s32 1, %s6
  %s9 = scalar_select 0, %s8, %s6
  $region1: #{tpu_custom_call.1} parent=0
    #allocation2 [shape = 'u8[4096]{0}', space=vmem, size = 0x1000, scoped, tag = 'input window, operand 0, single buffered']
    #allocation3 [shape = 's32[1]{0}', space=sflag, size = 0x4, scoped, tag = 'scoped memory for tpu_custom_call.1']
    #allocation4 [shape = 'u8[4096]{0}', space=vmem, size = 0x1000, scoped, tag = 'input window, operand 1, single buffered']
    #allocation5 [shape = 's32[1]{0}', space=sflag, size = 0x4, scoped, tag = 'scoped memory for tpu_custom_call.1']
    #allocation6 [shape = 'u8[16384]{0}', space=vmem, size = 0x4000, scoped, tag = 'input window, operand 2, single buffered']
    %10 = vsyncpa [#allocation3], 0
    %11 = vsyncpa [#allocation5], 0
    // Predicated region
    $region2: #{tpu_custom_call.1} parent=1 // pred_check
      _
    $region3: #{tpu_custom_call.1} parent=1 // pred_check_branch
      %13 = sbr.rel (0) target = $region5
    $region4: #{tpu_custom_call.1} parent=1 // pred_region
      %s15 = ssub.s32 128, 128
      %16 = vsyncadd [#allocation3], %s15
      %s18 = sshll.u32 [#allocation2], 4
      %s19 = int_to_ptr.vmem [resolvable:$true] %s18
      %21 = dma.hbm_to_vmem [thread:$0]  %s0, 128, %s19, [#allocation3]
    $region5: #{tpu_custom_call.1} parent=1 // pred_fallthru
      _
    // Predicated region
    $region6: #{tpu_custom_call.1} parent=1 // pred_check
      _
    $region7: #{tpu_custom_call.1} parent=1 // pred_check_branch
      %23 = sbr.rel (0) target = $region9
    $region8: #{tpu_custom_call.1} parent=1 // pred_region
      %s25 = ssub.s32 128, 128
      %26 = vsyncadd [#allocation5], %s25
      %s27 = sshll.u32 [#allocation4], 4
      %s28 = int_to_ptr.vmem [resolvable:$true] %s27
      %33 = dma.hbm_to_vmem [thread:$0]  %s1, 128, %s28, [#allocation5], 16, 16, 1
    $region9: #{tpu_custom_call.1} parent=1 // pred_fallthru
      _
    // Predicated region
    $region10: #{tpu_custom_call.1} parent=1 // pred_check
      _
    $region11: #{tpu_custom_call.1} parent=1 // pred_check_branch
      %35 = sbr.rel (0) target = $region13
    $region12: #{tpu_custom_call.1} parent=1 // pred_region
      %s37 = ssub.s32 512, 512
      %38 = vsyncadd [#allocation5], %s37
      %s39 = sshll.u32 [#allocation6], 4
      %s40 = int_to_ptr.vmem [resolvable:$true] %s39
      %45 = dma.hbm_to_vmem [thread:$0]  %s2, 512, %s40, [#allocation5], 64, 64, 4
    $region13: #{tpu_custom_call.1} parent=1 // pred_fallthru
      _
    // Predicated region
    $region14: #{tpu_custom_call.1} parent=1 // pred_check
      _
    $region15: #{tpu_custom_call.1} parent=1 // pred_check_branch
      %47 = sbr.rel (0) target = $region17
    $region16: #{tpu_custom_call.1} parent=1 // pred_region
      %48 = dma.done [#allocation3], 128
    $region17: #{tpu_custom_call.1} parent=1 // pred_fallthru
      _
    // Predicated region
    $region18: #{tpu_custom_call.1} parent=1 // pred_check
      _
    $region19: #{tpu_custom_call.1} parent=1 // pred_check_branch
      %50 = sbr.rel (0) target = $region21
    $region20: #{tpu_custom_call.1} parent=1 // pred_region
      %51 = dma.done [#allocation5], 128
    $region21: #{tpu_custom_call.1} parent=1 // pred_fallthru
      _
    // Predicated region
    $region22: #{tpu_custom_call.1} parent=1 // pred_check
      _
    $region23: #{tpu_custom_call.1} parent=1 // pred_check_branch
      %53 = sbr.rel (0) target = $region25
    $region24: #{tpu_custom_call.1} parent=1 // pred_region
      %54 = dma.done [#allocation5], 512
    $region25: #{tpu_custom_call.1} parent=1 // pred_fallthru
      _
    %v55 = vld [vmem:[#allocation2] sm:$0xff]
    %v56 = vmul.f32 %v55, %v55
    %vm57 = vcmask 261120
    %v58 = vsel %vm57, %v56, 0.0
    %59 = vadd.xlane.f32.xlu0 %v58
    %v60 = vpop.xlane.xlu0 %59
    %v61 = vld [vmem:[#allocation4] sm:$0x1]
    %v62 = vld [vmem:[#allocation4 + $0x1] sm:$0x1]
    %v63 = vld [vmem:[#allocation4 + $0x2] sm:$0x1]
    %v64 = vld [vmem:[#allocation4 + $0x3] sm:$0x1]
    %v65 = vld [vmem:[#allocation4 + $0x4] sm:$0x1]
    %v66 = vld [vmem:[#allocation4 + $0x5] sm:$0x1]
    %v67 = vld [vmem:[#allocation4 + $0x6] sm:$0x1]
    %v68 = vld [vmem:[#allocation4 + $0x7] sm:$0x1]
    %v77 = vcombine.low %v61, %v62
    %v78 = vcombine.low %v63, %v64
    %v79 = vcombine.low %v65, %v66
    %v80 = vcombine.low %v67, %v68
    %v82 = vunpack.c.l.s4 1966171168
    %v83 = vunpack.c.0.s8 %v82
    %v84 = vlaneseq
    %v85 = vshrl.u32 %v84, 7
    %v86 = vsub.s32 %v83, %v85
    %v87 = vrot.slane %v77, %v86
    %v89 = vunpack.c.l.s4 1966171168
    %v90 = vunpack.c.0.s8 %v89
    %v91 = vlaneseq
    %v92 = vshrl.u32 %v91, 7
    %v93 = vsub.s32 %v90, %v92
    %v94 = vrot.slane %v78, %v93
    %v96 = vunpack.c.l.s4 1966171168
    %v97 = vunpack.c.0.s8 %v96
    %v98 = vlaneseq
    %v99 = vshrl.u32 %v98, 7
    %v100 = vsub.s32 %v97, %v99
    %v101 = vrot.slane %v79, %v100
    %v103 = vunpack.c.l.s4 1966171168
    %v104 = vunpack.c.0.s8 %v103
    %v105 = vlaneseq
    %v106 = vshrl.u32 %v105, 7
    %v107 = vsub.s32 %v104, %v106
    %v108 = vrot.slane %v80, %v107
    %v109 = vcombine.low %v87, %v94
    %v110 = vcombine.low %v101, %v108
    %v112 = vunpack.c.l.s4 1966171168
    %v113 = vunpack.c.0.s8 %v112
    %v114 = vlaneseq
    %v115 = vshrl.u32 %v114, 7
    %v116 = vsub.s32 %v113, %v115
    %v117 = vrot.slane %v109, %v116
    %v119 = vunpack.c.l.s4 1966171168
    %v120 = vunpack.c.0.s8 %v119
    %v121 = vlaneseq
    %v122 = vshrl.u32 %v121, 7
    %v123 = vsub.s32 %v120, %v122
    %v124 = vrot.slane %v110, %v123
    %v125 = vcombine.low %v117, %v124
    %v127 = vmul.f32 %v55, %v125
    %v128 = vsel %vm57, %v127, 0.0
    %129 = vadd.xlane.f32.xlu0 %v128
    %v130 = vpop.xlane.xlu0 %129
    %v131 = vmul.f32 %v61, %v61
    %v132 = vmul.f32 %v62, %v62
    %v133 = vmul.f32 %v63, %v63
    %v134 = vmul.f32 %v64, %v64
    %v135 = vmul.f32 %v65, %v65
    %v136 = vmul.f32 %v66, %v66
    %v137 = vmul.f32 %v67, %v67
    %v138 = vmul.f32 %v68, %v68
    %v147 = vcombine.low %v131, %v132
    %v148 = vcombine.low %v133, %v134
    %v149 = vcombine.low %v135, %v136
    %v150 = vcombine.low %v137, %v138
    %v152 = vunpack.c.l.s4 1966171168
    %v153 = vunpack.c.0.s8 %v152
    %v154 = vlaneseq
    %v155 = vshrl.u32 %v154, 7
    %v156 = vsub.s32 %v153, %v155
    %v157 = vrot.slane %v147, %v156
    %v159 = vunpack.c.l.s4 1966171168
    %v160 = vunpack.c.0.s8 %v159
    %v161 = vlaneseq
    %v162 = vshrl.u32 %v161, 7
    %v163 = vsub.s32 %v160, %v162
    %v164 = vrot.slane %v148, %v163
    %v166 = vunpack.c.l.s4 1966171168
    %v167 = vunpack.c.0.s8 %v166
    %v168 = vlaneseq
    %v169 = vshrl.u32 %v168, 7
    %v170 = vsub.s32 %v167, %v169
    %v171 = vrot.slane %v149, %v170
    %v173 = vunpack.c.l.s4 1966171168
    %v174 = vunpack.c.0.s8 %v173
    %v175 = vlaneseq
    %v176 = vshrl.u32 %v175, 7
    %v177 = vsub.s32 %v174, %v176
    %v178 = vrot.slane %v150, %v177
    %v179 = vcombine.low %v157, %v164
    %v180 = vcombine.low %v171, %v178
    %v182 = vunpack.c.l.s4 1966171168
    %v183 = vunpack.c.0.s8 %v182
    %v184 = vlaneseq
    %v185 = vshrl.u32 %v184, 7
    %v186 = vsub.s32 %v183, %v185
    %v187 = vrot.slane %v179, %v186
    %v189 = vunpack.c.l.s4 1966171168
    %v190 = vunpack.c.0.s8 %v189
    %v191 = vlaneseq
    %v192 = vshrl.u32 %v191, 7
    %v193 = vsub.s32 %v190, %v192
    %v194 = vrot.slane %v180, %v193
    %v195 = vcombine.low %v187, %v194
    %v197 = vsel %vm57, %v195, 0.0
    %198 = vadd.xlane.f32.xlu0 %v197
    %v199 = vpop.xlane.xlu0 %198
    %v200 = vmul.f32 %v60, %v199
    %v201 = vmax.f32 %v200, 1e-16
    %v202 = vrsqrt.pop %v201
    %v203 = vmul.f32 %v130, %v202
    %vm204 = vcmask 7168
    %205 = vst.msk [vmem:[%s3] sm:$0xff] %vm204, %v203
    %v206 = vld [vmem:[#allocation6] sm:$0x1]
    %v207 = vld [vmem:[#allocation6 + $0x4] sm:$0x1]
    %v208 = vld [vmem:[#allocation6 + $0x8] sm:$0x1]
    %v209 = vld [vmem:[#allocation6 + $0xc] sm:$0x1]
    %v210 = vld [vmem:[#allocation6 + $0x10] sm:$0x1]
    %v211 = vld [vmem:[#allocation6 + $0x14] sm:$0x1]
    %v212 = vld [vmem:[#allocation6 + $0x18] sm:$0x1]
    %v213 = vld [vmem:[#allocation6 + $0x1c] sm:$0x1]
    %v222 = vrot.slane %v207, 7
    %vm223 = vcmask 1041409
    %v224 = vsel %vm223, %v222, %v206
    %v225 = vrot.slane %v208, 6
    %vm226 = vcmask 1042434
    %v227 = vsel %vm226, %v225, %v224
    %v228 = vrot.slane %v209, 5
    %vm229 = vcmask 1043459
    %v230 = vsel %vm229, %v228, %v227
    %v231 = vrot.slane %v210, 4
    %vm232 = vcmask 1044484
    %v233 = vsel %vm232, %v231, %v230
    %v234 = vrot.slane %v211, 3
    %vm235 = vcmask 1045509
    %v236 = vsel %vm235, %v234, %v233
    %v237 = vrot.slane %v212, 2
    %vm238 = vcmask 1046534
    %v239 = vsel %vm238, %v237, %v236
    %v240 = vrot.slane %v213, 1
    %vm241 = vcmask 1047559
    %v242 = vsel %vm241, %v240, %v239
    %v244 = vmul.f32 %v55, %v242
    %v245 = vsel %vm57, %v244, 0.0
    %246 = vadd.xlane.f32.xlu0 %v245
    %v247 = vpop.xlane.xlu0 %246
    %v248 = vmul.f32 %v206, %v206
    %v249 = vmul.f32 %v207, %v207
    %v250 = vmul.f32 %v208, %v208
    %v251 = vmul.f32 %v209, %v209
    %v252 = vmul.f32 %v210, %v210
    %v253 = vmul.f32 %v211, %v211
    %v254 = vmul.f32 %v212, %v212
    %v255 = vmul.f32 %v213, %v213
    %v264 = vrot.slane %v249, 7
    %v265 = vsel %vm223, %v264, %v248
    %v266 = vrot.slane %v250, 6
    %v267 = vsel %vm226, %v266, %v265
    %v268 = vrot.slane %v251, 5
    %v269 = vsel %vm229, %v268, %v267
    %v270 = vrot.slane %v252, 4
    %v271 = vsel %vm232, %v270, %v269
    %v272 = vrot.slane %v253, 3
    %v273 = vsel %vm235, %v272, %v271
    %v274 = vrot.slane %v254, 2
    %v275 = vsel %vm238, %v274, %v273
    %v276 = vrot.slane %v255, 1
    %v277 = vsel %vm241, %v276, %v275
    %v279 = vsel %vm57, %v277, 0.0
    %280 = vadd.xlane.f32.xlu0 %v279
    %v281 = vpop.xlane.xlu0 %280
    %v282 = vmul.f32 %v60, %v281
    %v283 = vmax.f32 %v282, 1e-16
    %v284 = vrsqrt.pop %v283
    %v285 = vmul.f32 %v247, %v284
    %286 = vst.msk [vmem:[%s4] sm:$0xff] %vm204, %v285
    %v287 = vld [vmem:[#allocation6 + $0x1] sm:$0x1]
    %v288 = vld [vmem:[#allocation6 + $0x5] sm:$0x1]
    %v289 = vld [vmem:[#allocation6 + $0x9] sm:$0x1]
    %v290 = vld [vmem:[#allocation6 + $0xd] sm:$0x1]
    %v291 = vld [vmem:[#allocation6 + $0x11] sm:$0x1]
    %v292 = vld [vmem:[#allocation6 + $0x15] sm:$0x1]
    %v293 = vld [vmem:[#allocation6 + $0x19] sm:$0x1]
    %v294 = vld [vmem:[#allocation6 + $0x1d] sm:$0x1]
    %v303 = vrot.slane %v288, 7
    %v304 = vsel %vm223, %v303, %v287
    %v305 = vrot.slane %v289, 6
    %v306 = vsel %vm226, %v305, %v304
    %v307 = vrot.slane %v290, 5
    %v308 = vsel %vm229, %v307, %v306
    %v309 = vrot.slane %v291, 4
    %v310 = vsel %vm232, %v309, %v308
    %v311 = vrot.slane %v292, 3
    %v312 = vsel %vm235, %v311, %v310
    %v313 = vrot.slane %v293, 2
    %v314 = vsel %vm238, %v313, %v312
    %v315 = vrot.slane %v294, 1
    %v316 = vsel %vm241, %v315, %v314
    %v318 = vmul.f32 %v55, %v316
    %v319 = vsel %vm57, %v318, 0.0
    %320 = vadd.xlane.f32.xlu0 %v319
    %v321 = vpop.xlane.xlu0 %320
    %v322 = vmul.f32 %v287, %v287
    %v323 = vmul.f32 %v288, %v288
    %v324 = vmul.f32 %v289, %v289
    %v325 = vmul.f32 %v290, %v290
    %v326 = vmul.f32 %v291, %v291
    %v327 = vmul.f32 %v292, %v292
    %v328 = vmul.f32 %v293, %v293
    %v329 = vmul.f32 %v294, %v294
    %v338 = vrot.slane %v323, 7
    %v339 = vsel %vm223, %v338, %v322
    %v340 = vrot.slane %v324, 6
    %v341 = vsel %vm226, %v340, %v339
    %v342 = vrot.slane %v325, 5
    %v343 = vsel %vm229, %v342, %v341
    %v344 = vrot.slane %v326, 4
    %v345 = vsel %vm232, %v344, %v343
    %v346 = vrot.slane %v327, 3
    %v347 = vsel %vm235, %v346, %v345
    %v348 = vrot.slane %v328, 2
    %v349 = vsel %vm238, %v348, %v347
    %v350 = vrot.slane %v329, 1
    %v351 = vsel %vm241, %v350, %v349
    %v353 = vsel %vm57, %v351, 0.0
    %354 = vadd.xlane.f32.xlu0 %v353
    %v355 = vpop.xlane.xlu0 %354
    %v356 = vmul.f32 %v60, %v355
    %v357 = vmax.f32 %v356, 1e-16
    %v358 = vrsqrt.pop %v357
    %v359 = vmul.f32 %v321, %v358
    %vm360 = vcmask 15368
    %361 = vst.msk [vmem:[%s4] sm:$0xff] %vm360, %v359
    %v362 = vld [vmem:[#allocation6 + $0x2] sm:$0x1]
    %v363 = vld [vmem:[#allocation6 + $0x6] sm:$0x1]
    %v364 = vld [vmem:[#allocation6 + $0xa] sm:$0x1]
    %v365 = vld [vmem:[#allocation6 + $0xe] sm:$0x1]
    %v366 = vld [vmem:[#allocation6 + $0x12] sm:$0x1]
    %v367 = vld [vmem:[#allocation6 + $0x16] sm:$0x1]
    %v368 = vld [vmem:[#allocation6 + $0x1a] sm:$0x1]
    %v369 = vld [vmem:[#allocation6 + $0x1e] sm:$0x1]
    %v378 = vrot.slane %v363, 7
    %v379 = vsel %vm223, %v378, %v362
    %v380 = vrot.slane %v364, 6
    %v381 = vsel %vm226, %v380, %v379
    %v382 = vrot.slane %v365, 5
    %v383 = vsel %vm229, %v382, %v381
    %v384 = vrot.slane %v366, 4
    %v385 = vsel %vm232, %v384, %v383
    %v386 = vrot.slane %v367, 3
    %v387 = vsel %vm235, %v386, %v385
    %v388 = vrot.slane %v368, 2
    %v389 = vsel %vm238, %v388, %v387
    %v390 = vrot.slane %v369, 1
    %v391 = vsel %vm241, %v390, %v389
    %v393 = vmul.f32 %v55, %v391
    %v394 = vsel %vm57, %v393, 0.0
    %395 = vadd.xlane.f32.xlu0 %v394
    %v396 = vpop.xlane.xlu0 %395
    %v397 = vmul.f32 %v362, %v362
    %v398 = vmul.f32 %v363, %v363
    %v399 = vmul.f32 %v364, %v364
    %v400 = vmul.f32 %v365, %v365
    %v401 = vmul.f32 %v366, %v366
    %v402 = vmul.f32 %v367, %v367
    %v403 = vmul.f32 %v368, %v368
    %v404 = vmul.f32 %v369, %v369
    %v413 = vrot.slane %v398, 7
    %v414 = vsel %vm223, %v413, %v397
    %v415 = vrot.slane %v399, 6
    %v416 = vsel %vm226, %v415, %v414
    %v417 = vrot.slane %v400, 5
    %v418 = vsel %vm229, %v417, %v416
    %v419 = vrot.slane %v401, 4
    %v420 = vsel %vm232, %v419, %v418
    %v421 = vrot.slane %v402, 3
    %v422 = vsel %vm235, %v421, %v420
    %v423 = vrot.slane %v403, 2
    %v424 = vsel %vm238, %v423, %v422
    %v425 = vrot.slane %v404, 1
    %v426 = vsel %vm241, %v425, %v424
    %v428 = vsel %vm57, %v426, 0.0
    %429 = vadd.xlane.f32.xlu0 %v428
    %v430 = vpop.xlane.xlu0 %429
    %v431 = vmul.f32 %v60, %v430
    %v432 = vmax.f32 %v431, 1e-16
    %v433 = vrsqrt.pop %v432
    %v434 = vmul.f32 %v396, %v433
    %vm435 = vcmask 23568
    %436 = vst.msk [vmem:[%s4] sm:$0xff] %vm435, %v434
    %v437 = vld [vmem:[#allocation6 + $0x3] sm:$0x1]
    %v438 = vld [vmem:[#allocation6 + $0x7] sm:$0x1]
    %v439 = vld [vmem:[#allocation6 + $0xb] sm:$0x1]
    %v440 = vld [vmem:[#allocation6 + $0xf] sm:$0x1]
    %v441 = vld [vmem:[#allocation6 + $0x13] sm:$0x1]
    %v442 = vld [vmem:[#allocation6 + $0x17] sm:$0x1]
    %v443 = vld [vmem:[#allocation6 + $0x1b] sm:$0x1]
    %v444 = vld [vmem:[#allocation6 + $0x1f] sm:$0x1]
    %v453 = vrot.slane %v438, 7
    %v454 = vsel %vm223, %v453, %v437
    %v455 = vrot.slane %v439, 6
    %v456 = vsel %vm226, %v455, %v454
    %v457 = vrot.slane %v440, 5
    %v458 = vsel %vm229, %v457, %v456
    %v459 = vrot.slane %v441, 4
    %v460 = vsel %vm232, %v459, %v458
    %v461 = vrot.slane %v442, 3
    %v462 = vsel %vm235, %v461, %v460
    %v463 = vrot.slane %v443, 2
    %v464 = vsel %vm238, %v463, %v462
    %v465 = vrot.slane %v444, 1
    %v466 = vsel %vm241, %v465, %v464
    %v468 = vmul.f32 %v55, %v466
    %v469 = vsel %vm57, %v468, 0.0
    %470 = vadd.xlane.f32.xlu0 %v469
    %v471 = vpop.xlane.xlu0 %470
    %v472 = vmul.f32 %v437, %v437
    %v473 = vmul.f32 %v438, %v438
    %v474 = vmul.f32 %v439, %v439
    %v475 = vmul.f32 %v440, %v440
    %v476 = vmul.f32 %v441, %v441
    %v477 = vmul.f32 %v442, %v442
    %v478 = vmul.f32 %v443, %v443
    %v479 = vmul.f32 %v444, %v444
    %v488 = vrot.slane %v473, 7
    %v489 = vsel %vm223, %v488, %v472
    %v490 = vrot.slane %v474, 6
    %v491 = vsel %vm226, %v490, %v489
    %v492 = vrot.slane %v475, 5
    %v493 = vsel %vm229, %v492, %v491
    %v494 = vrot.slane %v476, 4
    %v495 = vsel %vm232, %v494, %v493
    %v496 = vrot.slane %v477, 3
    %v497 = vsel %vm235, %v496, %v495
    %v498 = vrot.slane %v478, 2
    %v499 = vsel %vm238, %v498, %v497
    %v500 = vrot.slane %v479, 1
    %v501 = vsel %vm241, %v500, %v499
    %v503 = vsel %vm57, %v501, 0.0
    %504 = vadd.xlane.f32.xlu0 %v503
    %v505 = vpop.xlane.xlu0 %504
    %v506 = vmul.f32 %v60, %v505
    %v507 = vmax.f32 %v506, 1e-16
    %v508 = vrsqrt.pop %v507
    %v509 = vmul.f32 %v471, %v508
    %vm510 = vcmask 31768
    %511 = vst.msk [vmem:[%s4] sm:$0xff] %vm510, %v509
    // Predicated region
    $region26: #{tpu_custom_call.1} parent=1 // pred_check
      _
    $region27: #{tpu_custom_call.1} parent=1 // pred_check_branch
      %513 = sbr.rel (0) target = $region29
    $region28: #{tpu_custom_call.1} parent=1 // pred_region
      _
    $region29: #{tpu_custom_call.1} parent=1 // pred_fallthru
      _
    // Predicated region
    $region30: #{tpu_custom_call.1} parent=1 // pred_check
      _
    $region31: #{tpu_custom_call.1} parent=1 // pred_check_branch
      %515 = sbr.rel (0) target = $region33
    $region32: #{tpu_custom_call.1} parent=1 // pred_region
      _
    $region33: #{tpu_custom_call.1} parent=1 // pred_fallthru
      _
    // Predicated region
    $region34: #{tpu_custom_call.1} parent=1 // pred_check
      _
    $region35: #{tpu_custom_call.1} parent=1 // pred_check_branch
      %517 = sbr.rel (0) target = $region37
    $region36: #{tpu_custom_call.1} parent=1 // pred_region
      _
    $region37: #{tpu_custom_call.1} parent=1 // pred_fallthru
      _
    // Predicated region
    $region38: #{tpu_custom_call.1} parent=1 // pred_check
      _
    $region39: #{tpu_custom_call.1} parent=1 // pred_check_branch
      %519 = sbr.rel (0) target = $region41
    $region40: #{tpu_custom_call.1} parent=1 // pred_region
      _
    $region41: #{tpu_custom_call.1} parent=1 // pred_fallthru
      _
    %520 = vsyncpa [#allocation3], 1
    %521 = vsyncpa [#allocation5], 1

</llo_original>
